<compile_context>
chip_gen: v6e
topology: v6e:2x2x1
jax: 0.10.0
libtpu: 0.0.40
codegen_flags: <defaults>
</compile_context>

<pallas_src>
from functools import partial

import jax
import jax.numpy as jnp
from jax.experimental import pallas as pl
from jax.experimental.pallas import tpu as pltpu


def _featguide_drop_kernel(x_ref, w1_ref, w2_ref, ah_ref, aw_ref, wi_ref, o_ref):
    """One tile of Bt batch elements per grid step.

    x_ref:  (Bt, C, HW)  input feature map (flattened spatial), f32
    w1_ref: (Cr, C)      SE fc1 weight (bias-free SELayer), bf16
    w2_ref: (C, Cr)      SE fc2 weight, bf16
    ah_ref: (H, HW)      row part of the separable 3x3 operator, bf16 (0/1)
    aw_ref: (HW, W)      col part of the separable 3x3 operator, bf16 (0/1)
    wi_ref: (1, 1)       w_i parameter, f32, SMEM
    o_ref:  (Bt, C, HW)  output
    """
    bt, c, hw = x_ref.shape

    wi = wi_ref[0, 0]                                   # scalar from SMEM
    w1 = w1_ref[...]                                    # (Cr, C)  bf16
    w2 = w2_ref[...]                                    # (C, Cr)  bf16
    ah = ah_ref[...]                                    # (H, HW)  bf16
    aw = aw_ref[...]                                    # (HW, W)  bf16

    inv_n = jnp.float32(1.0 / hw)
    inv_nm1 = jnp.float32(1.0 / max(hw - 1, 1))         # guard HW == 1
    inv_9 = jnp.float32(1.0 / 9.0)
    # Channel-mean as an MXU row-vector matmul (keeps the cross-sublane
    # reduction off the XLU). Hoisted out of the unrolled batch loop.
    mean_row = jnp.full((1, c), 1.0 / c, dtype=jnp.float32)

    for b in range(bt):                                 # static unroll over the batch tile
        xb = x_ref[b].astype(jnp.float32)               # (C, HW)

        # ---- SELayer: global avg-pool -> fc1 -> ReLU -> fc2 -> sigmoid -> channel scale
        s = jnp.mean(xb, axis=1, keepdims=True)         # (C, 1)
        h1 = jnp.maximum(
            jnp.dot(w1, s.astype(jnp.bfloat16),
                    preferred_element_type=jnp.float32), 0.0)        # (Cr, 1)
        y = jax.nn.sigmoid(
            jnp.dot(w2, h1.astype(jnp.bfloat16),
                    preferred_element_type=jnp.float32))              # (C, 1)
        x_se = xb * y                                   # (C, HW)

        # ---- sigmoid(adaptive_avg_pool(unfold(x, 3, pad=1))):
        # channel mean (MXU), then separable 3x3 zero-padded box-sum / 9:
        #   p[i, j] = sum_s AH[i, s] * m[s] * AW[s, j]
        m = jnp.dot(mean_row, x_se,
                    preferred_element_type=jnp.float32)               # (1, HW)
        u = ah * m.astype(jnp.bfloat16)                                # (H, HW) bf16
        p = jnp.dot(u, aw, preferred_element_type=jnp.float32) * inv_9  # (H, W)
        f = jax.nn.sigmoid(p)                                          # (H, W)

        # ---- threshold: w_i * var(f) + mean(f)   (torch.var default: unbiased)
        mean_f = jnp.sum(f) * inv_n
        var_f = jnp.sum((f - mean_f) ** 2) * inv_nm1
        thr = wi * var_f + mean_f

        # ---- mask = ones; mask[mask > thr] = 0  ==> per-batch all-or-nothing gate
        gate = jnp.where(thr >= 1.0, jnp.float32(1.0), jnp.float32(0.0))

        o_ref[b] = (x_se * gate).astype(o_ref.dtype)


def _pick_block_batch(b, c, hw, bytes_per_elem=4, vmem_budget=8 << 20):
    """Largest divisor Bt of B whose double-buffered in+out blocks fit the budget,
    preferring a grid of >= 2 steps so v7x can split work across both TensorCores."""
    best = 1
    for d in range(1, b + 1):
        if b % d:
            continue
        if 4 * d * c * hw * bytes_per_elem > vmem_budget:  # 2 in bufs + 2 out bufs
            continue
        if b // d >= 2 or b == 1:
            best = d
    return best


def _featguide_drop_impl(x, se_w1, se_w2, w_i):
    b, c, h, w = x.shape
    hw = h * w
    cr = se_w1.shape[0]
    bt = _pick_block_batch(b, c, hw)
    grid = b // bt

    # Glue: flatten spatial dims (lane-dense layout documented above).
    x2 = x.reshape(b, c, hw)

    # Separable 3x3 zero-padded neighborhood operators in flattened-spatial form
    # (tiny: H*HW + HW*W elements; nothing O(HW^2) is built):
    #   AH[i, s] = 1 iff |s // W - i| <= 1
    #   AW[s, j] = 1 iff |s %  W - j| <= 1
    s_idx = jnp.arange(hw, dtype=jnp.int32)
    row = s_idx // w
    col = s_idx % w
    ah = (jnp.abs(row[None, :] - jnp.arange(h, dtype=jnp.int32)[:, None]) <= 1
          ).astype(jnp.bfloat16)                                   # (H, HW)
    aw = (jnp.abs(col[:, None] - jnp.arange(w, dtype=jnp.int32)[None, :]) <= 1
          ).astype(jnp.bfloat16)                                   # (HW, W)

    w1 = se_w1.astype(jnp.bfloat16)                                # (Cr, C)
    w2 = se_w2.astype(jnp.bfloat16)                                # (C, Cr)
    wi2 = jnp.asarray(w_i, jnp.float32).reshape(1, 1)              # (1, 1)

    out2 = pl.pallas_call(
        _featguide_drop_kernel,
        out_shape=jax.ShapeDtypeStruct((b, c, hw), x.dtype),
        grid_spec=pltpu.PrefetchScalarGridSpec(
            num_scalar_prefetch=0,
            grid=(grid,),
            in_specs=[
                pl.BlockSpec((bt, c, hw), lambda i: (i, 0, 0)),    # x tile
                pl.BlockSpec((cr, c), lambda i: (0, 0)),           # SE fc1 weight
                pl.BlockSpec((c, cr), lambda i: (0, 0)),           # SE fc2 weight
                pl.BlockSpec((h, hw), lambda i: (0, 0)),           # AH
                pl.BlockSpec((hw, w), lambda i: (0, 0)),           # AW
                pl.BlockSpec((1, 1), lambda i: (0, 0),
                             memory_space=pltpu.MemorySpace.SMEM), # w_i (scalar)
            ],
            out_specs=pl.BlockSpec((bt, c, hw), lambda i: (i, 0, 0)),
        ),
        compiler_params=pltpu.CompilerParams(
            dimension_semantics=("parallel",)),
        input_output_aliases={0: 0},                               # write back in place
    )(x2, w1, w2, ah, aw, wi2)

    return out2.reshape(b, c, h, w)


@partial(jax.jit, static_argnames=("training",), donate_argnums=(0,))
def featguide_drop(x, se_w1, se_w2, w_i, *, training=True):
    """x: (B, C, H, W) NCHW float32.  Returns (B, C, H, W)."""
    if not training:
        return x
    return _featguide_drop_impl(x, se_w1, se_w2, w_i)


if __name__ == "__main__":
    key = jax.random.PRNGKey(0)
    B, C, H, W = 2, 16, 16, 16
    REDUCTION = 4  # SELayer reduction ratio (so C // r >= 1)

    k_x, k_w1, k_w2 = jax.random.split(key, 3)
    x = jax.random.normal(k_x, (B, C, H, W), jnp.float32)
    # Deterministic bias-free SELayer weights (Linear -> ReLU -> Linear -> Sigmoid)
    se_w1 = 0.1 * jax.random.normal(k_w1, (C // REDUCTION, C), jnp.float32)
    se_w2 = 0.1 * jax.random.normal(k_w2, (C, C // REDUCTION), jnp.float32)
    # nn.Parameter(torch.zeros(1))
    w_i = jnp.zeros((1,), jnp.float32)

    out = featguide_drop(x, se_w1, se_w2, w_i, training=True)
    jax.block_until_ready(out)
    assert out.shape == (B, C, H, W)
    print("KERNEL_OK")
</pallas_src>

<mosaic_0001>
module attributes {stable_mosaic.version = 11 : i64} {
  func.func @_featguide_drop_kernel(%arg0: i32, %arg1: memref<1x16x256xf32, #tpu.memory_space<vmem>>, %arg2: memref<4x16xbf16, #tpu.memory_space<vmem>>, %arg3: memref<16x4xbf16, #tpu.memory_space<vmem>>, %arg4: memref<16x256xbf16, #tpu.memory_space<vmem>>, %arg5: memref<256x16xbf16, #tpu.memory_space<vmem>>, %arg6: memref<1x1xf32, #tpu.memory_space<smem>>, %arg7: memref<1x16x256xf32, #tpu.memory_space<vmem>>) attributes {dimension_semantics = [#tpu.dimension_semantics<parallel>], iteration_bounds = array<i64: 2>, scalar_prefetch = 0 : i64, scratch_operands = 0 : i64, tpu.core_type = #tpu.core_type<tc>, window_params = [{transform_indices = @transform_0, window_bounds = array<i64: 1, 16, 256>}, {pipeline_mode = #tpu.pipeline_mode<synchronous>, transform_indices = @transform_1, window_bounds = array<i64: 4, 16>}, {pipeline_mode = #tpu.pipeline_mode<synchronous>, transform_indices = @transform_2, window_bounds = array<i64: 16, 4>}, {pipeline_mode = #tpu.pipeline_mode<synchronous>, transform_indices = @transform_3, window_bounds = array<i64: 16, 256>}, {pipeline_mode = #tpu.pipeline_mode<synchronous>, transform_indices = @transform_4, window_bounds = array<i64: 256, 16>}, {transform_indices = @transform_5, window_bounds = array<i64: 1, 1>}, {transform_indices = @transform_6, window_bounds = array<i64: 1, 16, 256>}]} {
    %c0 = arith.constant 0 : index
    %c0_0 = arith.constant 0 : index
    %0 = memref.load %arg6[%c0, %c0_0] : memref<1x1xf32, #tpu.memory_space<smem>>
    %c0_1 = arith.constant 0 : index
    %c0_2 = arith.constant 0 : index
    %1 = vector.load %arg2[%c0_1, %c0_2] : memref<4x16xbf16, #tpu.memory_space<vmem>>, vector<4x16xbf16>
    %c0_3 = arith.constant 0 : index
    %c0_4 = arith.constant 0 : index
    %2 = vector.load %arg3[%c0_3, %c0_4] : memref<16x4xbf16, #tpu.memory_space<vmem>>, vector<16x4xbf16>
    %c0_5 = arith.constant 0 : index
    %c0_6 = arith.constant 0 : index
    %3 = vector.load %arg4[%c0_5, %c0_6] : memref<16x256xbf16, #tpu.memory_space<vmem>>, vector<16x256xbf16>
    %c0_7 = arith.constant 0 : index
    %c0_8 = arith.constant 0 : index
    %4 = vector.load %arg5[%c0_7, %c0_8] : memref<256x16xbf16, #tpu.memory_space<vmem>>, vector<256x16xbf16>
    %cst = arith.constant 6.250000e-02 : f32
    %5 = vector.broadcast %cst : f32 to vector<1x16xf32>
    %c0_9 = arith.constant 0 : index
    %c0_10 = arith.constant 0 : index
    %c0_11 = arith.constant 0 : index
    %6 = vector.load %arg1[%c0_9, %c0_10, %c0_11] : memref<1x16x256xf32, #tpu.memory_space<vmem>>, vector<1x16x256xf32>
    %7 = vector.shape_cast %6 : vector<1x16x256xf32> to vector<16x256xf32>
    %cst_12 = arith.constant dense<0.000000e+00> : vector<16xf32>
    %8 = vector.multi_reduction <add>, %7, %cst_12 [1] : vector<16x256xf32> to vector<16xf32>
    %9 = vector.shape_cast %8 : vector<16xf32> to vector<16x1xf32>
    %cst_13 = arith.constant 2.560000e+02 : f32
    %10 = vector.broadcast %cst_13 : f32 to vector<16x1xf32>
    %11 = arith.divf %9, %10 : vector<16x1xf32>
    %12 = arith.truncf %11 : vector<16x1xf32> to vector<16x1xbf16>
    %cst_14 = arith.constant dense<0.000000e+00> : vector<4x1xf32>
    %13 = tpu.matmul %1, %12, %cst_14 {dimension_numbers = #tpu.dot_dimension_numbers<[1], [0], [0], [1], [0, 0, 1, 1], [], []>} : vector<4x16xbf16>, vector<16x1xbf16>, vector<4x1xf32> -> vector<4x1xf32>
    %cst_15 = arith.constant 0.000000e+00 : f32
    %14 = vector.broadcast %cst_15 : f32 to vector<4x1xf32>
    %15 = arith.maximumf %13, %14 : vector<4x1xf32>
    %16 = arith.truncf %15 : vector<4x1xf32> to vector<4x1xbf16>
    %cst_16 = arith.constant dense<0.000000e+00> : vector<16x1xf32>
    %17 = tpu.matmul %2, %16, %cst_16 {dimension_numbers = #tpu.dot_dimension_numbers<[1], [0], [0], [1], [0, 0, 1, 1], [], []>} : vector<16x4xbf16>, vector<4x1xbf16>, vector<16x1xf32> -> vector<16x1xf32>
    %18 = arith.negf %17 : vector<16x1xf32>
    %19 = math.exp %18 : vector<16x1xf32>
    %cst_17 = arith.constant 1.000000e+00 : f32
    %20 = vector.broadcast %cst_17 : f32 to vector<16x1xf32>
    %21 = arith.addf %20, %19 : vector<16x1xf32>
    %22 = arith.divf %20, %21 : vector<16x1xf32>
    %23 = vector.broadcast %22 : vector<16x1xf32> to vector<16x256xf32>
    %24 = arith.mulf %7, %23 : vector<16x256xf32>
    %cst_18 = arith.constant dense<0.000000e+00> : vector<1x256xf32>
    %25 = tpu.matmul %5, %24, %cst_18 {dimension_numbers = #tpu.dot_dimension_numbers<[1], [0], [0], [1], [0, 0, 1, 1], [], []>} : vector<1x16xf32>, vector<16x256xf32>, vector<1x256xf32> -> vector<1x256xf32>
    %26 = arith.truncf %25 : vector<1x256xf32> to vector<1x256xbf16>
    %27 = vector.broadcast %26 : vector<1x256xbf16> to vector<16x256xbf16>
    %28 = arith.mulf %3, %27 : vector<16x256xbf16>
    %cst_19 = arith.constant dense<0.000000e+00> : vector<16x16xf32>
    %29 = tpu.matmul %28, %4, %cst_19 {dimension_numbers = #tpu.dot_dimension_numbers<[1], [0], [0], [1], [0, 0, 1, 1], [], []>} : vector<16x256xbf16>, vector<256x16xbf16>, vector<16x16xf32> -> vector<16x16xf32>
    %cst_20 = arith.constant 0.111111112 : f32
    %30 = vector.broadcast %cst_20 : f32 to vector<16x16xf32>
    %31 = arith.mulf %29, %30 : vector<16x16xf32>
    %32 = arith.negf %31 : vector<16x16xf32>
    %33 = math.exp %32 : vector<16x16xf32>
    %cst_21 = arith.constant 1.000000e+00 : f32
    %34 = vector.broadcast %cst_21 : f32 to vector<16x16xf32>
    %35 = arith.addf %34, %33 : vector<16x16xf32>
    %36 = arith.divf %34, %35 : vector<16x16xf32>
    %37 = vector.shape_cast %36 : vector<16x16xf32> to vector<1x16x16xf32>
    %cst_22 = arith.constant dense<0.000000e+00> : vector<1xf32>
    %38 = vector.multi_reduction <add>, %37, %cst_22 [1, 2] : vector<1x16x16xf32> to vector<1xf32>
    %39 = vector.shape_cast %38 : vector<1xf32> to vector<1x1x1xf32>
    %40 = vector.extract %39[0, 0, 0] : f32 from vector<1x1x1xf32>
    %cst_23 = arith.constant 3.906250e-03 : f32
    %41 = arith.mulf %40, %cst_23 : f32
    %42 = vector.broadcast %41 : f32 to vector<16x16xf32>
    %43 = arith.subf %36, %42 : vector<16x16xf32>
    %44 = arith.mulf %43, %43 : vector<16x16xf32>
    %45 = vector.shape_cast %44 : vector<16x16xf32> to vector<1x16x16xf32>
    %cst_24 = arith.constant dense<0.000000e+00> : vector<1xf32>
    %46 = vector.multi_reduction <add>, %45, %cst_24 [1, 2] : vector<1x16x16xf32> to vector<1xf32>
    %47 = vector.shape_cast %46 : vector<1xf32> to vector<1x1x1xf32>
    %48 = vector.extract %47[0, 0, 0] : f32 from vector<1x1x1xf32>
    %cst_25 = arith.constant 0.00392156886 : f32
    %49 = arith.mulf %48, %cst_25 : f32
    %50 = arith.mulf %0, %49 : f32
    %51 = arith.addf %50, %41 : f32
    %cst_26 = arith.constant 1.000000e+00 : f32
    %52 = arith.cmpf oge, %51, %cst_26 : f32
    %cst_27 = arith.constant 1.000000e+00 : f32
    %cst_28 = arith.constant 0.000000e+00 : f32
    %53 = arith.select %52, %cst_27, %cst_28 : f32
    %54 = vector.broadcast %53 : f32 to vector<16x256xf32>
    %55 = arith.mulf %24, %54 : vector<16x256xf32>
    %c0_29 = arith.constant 0 : index
    %c0_30 = arith.constant 0 : index
    %c0_31 = arith.constant 0 : index
    %56 = vector.load %arg7[%c0_29, %c0_30, %c0_31] : memref<1x16x256xf32, #tpu.memory_space<vmem>>, vector<1x16x256xf32>
    %57 = vector.shape_cast %56 : vector<1x16x256xf32> to vector<16x256xf32>
    %58 = vector.shape_cast %55 : vector<16x256xf32> to vector<1x16x256xf32>
    tpu.vector_store %arg7[%c0_29, %c0_30, %c0_31], %58 {strides = array<i32>} : memref<1x16x256xf32, #tpu.memory_space<vmem>>, vector<1x16x256xf32>,
    return
  }
  func.func @transform_0(%arg0: i32) -> (i32, i32, i32) {
    %c0_i32 = arith.constant 0 : i32
    %c0_i32_0 = arith.constant 0 : i32
    %c0_i32_1 = arith.constant 0 : i32
    return %arg0, %c0_i32, %c0_i32_0 : i32, i32, i32
  }
  func.func @transform_1(%arg0: i32) -> (i32, i32) {
    %c0_i32 = arith.constant 0 : i32
    %c0_i32_0 = arith.constant 0 : i32
    %c0_i32_1 = arith.constant 0 : i32
    return %c0_i32, %c0_i32_0 : i32, i32
  }
  func.func @transform_2(%arg0: i32) -> (i32, i32) {
    %c0_i32 = arith.constant 0 : i32
    %c0_i32_0 = arith.constant 0 : i32
    %c0_i32_1 = arith.constant 0 : i32
    return %c0_i32, %c0_i32_0 : i32, i32
  }
  func.func @transform_3(%arg0: i32) -> (i32, i32) {
    %c0_i32 = arith.constant 0 : i32
    %c0_i32_0 = arith.constant 0 : i32
    %c0_i32_1 = arith.constant 0 : i32
    return %c0_i32, %c0_i32_0 : i32, i32
  }
  func.func @transform_4(%arg0: i32) -> (i32, i32) {
    %c0_i32 = arith.constant 0 : i32
    %c0_i32_0 = arith.constant 0 : i32
    %c0_i32_1 = arith.constant 0 : i32
    return %c0_i32, %c0_i32_0 : i32, i32
  }
  func.func @transform_5(%arg0: i32) -> (i32, i32) {
    %c0_i32 = arith.constant 0 : i32
    %c0_i32_0 = arith.constant 0 : i32
    %c0_i32_1 = arith.constant 0 : i32
    return %c0_i32, %c0_i32_0 : i32, i32
  }
  func.func @transform_6(%arg0: i32) -> (i32, i32, i32) {
    %c0_i32 = arith.constant 0 : i32
    %c0_i32_0 = arith.constant 0 : i32
    %c0_i32_1 = arith.constant 0 : i32
    return %arg0, %c0_i32, %c0_i32_0 : i32, i32, i32
  }
}

</mosaic_0001>

<llo_original>
// kernel: featguide_drop.1
$region0: #{featguide_drop.1}
  #allocation0 [shape = 'u32[]', space=smem, size = 0x4, offset = 0x4, fixed_abs, tag = 'smem constant byte address 0x4 - core index']
  #allocation1 [shape = 'u32[144,128]{1,0:T(1,128)}', space=vmem, size = 0x12000, scoped, tag = 'internal scratch']
  #allocation2 [shape = 'f32[1,1]{1,0:T(1,128)S(6)}', space=smem, size = 0x200, scoped, tag = 'scoped memory for featguide_drop.1']
  %s0 = inlined_call_operand.vmem [shape: f32[2,16,256], index: 0, kind: input, shape index: {}, may-alias: {0,6}]
  %s1 = inlined_call_operand.vmem [shape: bf16[4,16], index: 1, kind: input, shape index: {}]
  %s2 = inlined_call_operand.vmem [shape: bf16[16,4], index: 2, kind: input, shape index: {}]
  %s3 = inlined_call_operand.vmem [shape: bf16[16,256], index: 3, kind: input, shape index: {}]
  %s4 = inlined_call_operand.vmem [shape: bf16[256,16], index: 4, kind: input, shape index: {}]
  %s5 = inlined_call_operand.<no memory space> [shape: f32[1,1], index: 5, kind: input, shape index: {}]
  %s6 = inlined_call_operand.vmem [shape: f32[2,16,256], index: 6, kind: output, shape index: {}, may-alias: {0,6}]
  %s7 = sld [smem:[#allocation0]]
  $region57: #{featguide_drop.1} parent=0
    _
  %s9 = ssub.s32 1, %s7
  %s10 = scalar_select 0, %s9, %s7
  %11 = sst [smem:[#allocation2]] %s5
  loop: start=0, step=1, limit=4
  $region2: #{featguide_drop.1} parent=0 // loop_pre_header
    _
  $region3: #{featguide_drop.1} parent=0 // loop_header
    %s13 = sphi 0, %s17
    %p14 = scmp.ge.s32.totalorder %s13, 4
    %s23 = sphi 0, %s25
    %s26 = sphi 0, %s23
    %s27 = sphi 0, %s26
    %s43 = sphi 0, %s27
    %s47 = sphi 0, %s47
    %s49 = sphi 0, %s47
    %s50 = sphi 0, %s49
    %s64 = sphi 0, %s50
    %s68 = sphi 0, %s68
    %s70 = sphi 0, %s68
    %s71 = sphi 0, %s70
    %s85 = sphi 0, %s71
    %s89 = sphi 0, %s89
    %s91 = sphi 0, %s89
    %s92 = sphi 0, %s91
    %s106 = sphi 0, %s92
    %s110 = sphi 0, %s110
    %s112 = sphi 0, %s110
    %s113 = sphi 0, %s112
    %s127 = sphi 0, %s113
    %s131 = sphi 0, %s131
    %s133 = sphi 0, %s131
    %s134 = sphi 0, %s133
    %s148 = sphi 0, %s134
    %s154 = sphi 0, %s156
    %s157 = sphi 0, %s154
    %s158 = sphi 0, %s157
    %s174 = sphi 0, %s158
  $region4: #{featguide_drop.1} parent=0 // loop_header_branch
    %16 = sbr.rel (%p14) target = $region8
  $region5: #{featguide_drop.1} parent=0 // loop_body
    %s18 = ssub.s32 %s13, 1
    %s19 = ssub.s32 %s13, 2
    %s20 = sadd.s32 %s13, 1
    %s21 = ssub.s32 %s13, %s20
    %p22 = scmp.eq.s32.totalorder %s21, 0
    %s24 = sadd.s32 %s23, 1
    %s25 = scalar_select %p22, %s23, %s24
    %p28 = pneg %p22
    %p29 = scmp.eq.s32.totalorder %s13, 1
    %p30 = por %p28, %p29
    %p31 = scmp.ne.s32.totalorder %s23, %s26
    %p32 = scmp.eq.s32.totalorder %s13, 0
    %p33 = por %p31, %p32
    %p34 = scmp.ne.s32.totalorder %s23, %s26
    %p35 = scmp.eq.s32.totalorder %s18, 1
    %p36 = por %p34, %p35
    %p37 = scmp.ne.s32.totalorder %s26, %s27
    %p38 = scmp.eq.s32.totalorder %s18, 0
    %p39 = por %p37, %p38
    %p40 = scmp.ne.s32.totalorder %s26, %s27
    %p41 = scmp.eq.s32.totalorder %s19, 1
    %p42 = por %p40, %p41
    %p44 = scmp.ne.s32.totalorder %s27, %s43
    %p45 = scmp.eq.s32.totalorder %s19, 0
    %p46 = por %p44, %p45
    %s48 = sadd.s32 %s47, 1
    %p51 = scmp.eq.s32.totalorder %s13, 1
    %p52 = scmp.ne.s32.totalorder %s47, %s49
    %p53 = scmp.eq.s32.totalorder %s13, 0
    %p54 = por %p52, %p53
    %p55 = scmp.ne.s32.totalorder %s47, %s49
    %p56 = scmp.eq.s32.totalorder %s18, 1
    %p57 = por %p55, %p56
    %p58 = scmp.ne.s32.totalorder %s49, %s50
    %p59 = scmp.eq.s32.totalorder %s18, 0
    %p60 = por %p58, %p59
    %p61 = scmp.ne.s32.totalorder %s49, %s50
    %p62 = scmp.eq.s32.totalorder %s19, 1
    %p63 = por %p61, %p62
    %p65 = scmp.ne.s32.totalorder %s50, %s64
    %p66 = scmp.eq.s32.totalorder %s19, 0
    %p67 = por %p65, %p66
    %s69 = sadd.s32 %s68, 1
    %p72 = scmp.eq.s32.totalorder %s13, 1
    %p73 = scmp.ne.s32.totalorder %s68, %s70
    %p74 = scmp.eq.s32.totalorder %s13, 0
    %p75 = por %p73, %p74
    %p76 = scmp.ne.s32.totalorder %s68, %s70
    %p77 = scmp.eq.s32.totalorder %s18, 1
    %p78 = por %p76, %p77
    %p79 = scmp.ne.s32.totalorder %s70, %s71
    %p80 = scmp.eq.s32.totalorder %s18, 0
    %p81 = por %p79, %p80
    %p82 = scmp.ne.s32.totalorder %s70, %s71
    %p83 = scmp.eq.s32.totalorder %s19, 1
    %p84 = por %p82, %p83
    %p86 = scmp.ne.s32.totalorder %s71, %s85
    %p87 = scmp.eq.s32.totalorder %s19, 0
    %p88 = por %p86, %p87
    %s90 = sadd.s32 %s89, 1
    %p93 = scmp.eq.s32.totalorder %s13, 1
    %p94 = scmp.ne.s32.totalorder %s89, %s91
    %p95 = scmp.eq.s32.totalorder %s13, 0
    %p96 = por %p94, %p95
    %p97 = scmp.ne.s32.totalorder %s89, %s91
    %p98 = scmp.eq.s32.totalorder %s18, 1
    %p99 = por %p97, %p98
    %p100 = scmp.ne.s32.totalorder %s91, %s92
    %p101 = scmp.eq.s32.totalorder %s18, 0
    %p102 = por %p100, %p101
    %p103 = scmp.ne.s32.totalorder %s91, %s92
    %p104 = scmp.eq.s32.totalorder %s19, 1
    %p105 = por %p103, %p104
    %p107 = scmp.ne.s32.totalorder %s92, %s106
    %p108 = scmp.eq.s32.totalorder %s19, 0
    %p109 = por %p107, %p108
    %s111 = sadd.s32 %s110, 1
    %p114 = scmp.eq.s32.totalorder %s13, 1
    %p115 = scmp.ne.s32.totalorder %s110, %s112
    %p116 = scmp.eq.s32.totalorder %s13, 0
    %p117 = por %p115, %p116
    %p118 = scmp.ne.s32.totalorder %s110, %s112
    %p119 = scmp.eq.s32.totalorder %s18, 1
    %p120 = por %p118, %p119
    %p121 = scmp.ne.s32.totalorder %s112, %s113
    %p122 = scmp.eq.s32.totalorder %s18, 0
    %p123 = por %p121, %p122
    %p124 = scmp.ne.s32.totalorder %s112, %s113
    %p125 = scmp.eq.s32.totalorder %s19, 1
    %p126 = por %p124, %p125
    %p128 = scmp.ne.s32.totalorder %s113, %s127
    %p129 = scmp.eq.s32.totalorder %s19, 0
    %p130 = por %p128, %p129
    %s132 = sadd.s32 %s131, 1
    %p135 = scmp.eq.s32.totalorder %s13, 1
    %p136 = scmp.ne.s32.totalorder %s131, %s133
    %p137 = scmp.eq.s32.totalorder %s13, 0
    %p138 = por %p136, %p137
    %p139 = scmp.ne.s32.totalorder %s131, %s133
    %p140 = scmp.eq.s32.totalorder %s18, 1
    %p141 = por %p139, %p140
    %p142 = scmp.ne.s32.totalorder %s133, %s134
    %p143 = scmp.eq.s32.totalorder %s18, 0
    %p144 = por %p142, %p143
    %p145 = scmp.ne.s32.totalorder %s133, %s134
    %p146 = scmp.eq.s32.totalorder %s19, 1
    %p147 = por %p145, %p146
    %p149 = scmp.ne.s32.totalorder %s134, %s148
    %p150 = scmp.eq.s32.totalorder %s19, 0
    %p151 = por %p149, %p150
    %s152 = ssub.s32 %s13, %s20
    %p153 = scmp.eq.s32.totalorder %s152, 0
    %s155 = sadd.s32 %s154, 1
    %s156 = scalar_select %p153, %s154, %s155
    %p159 = pneg %p153
    %p160 = scmp.eq.s32.totalorder %s13, 1
    %p161 = por %p159, %p160
    %p162 = scmp.ne.s32.totalorder %s154, %s157
    %p163 = scmp.eq.s32.totalorder %s13, 0
    %p164 = por %p162, %p163
    %p165 = scmp.ne.s32.totalorder %s154, %s157
    %p166 = scmp.eq.s32.totalorder %s18, 1
    %p167 = por %p165, %p166
    %p168 = scmp.ne.s32.totalorder %s157, %s158
    %p169 = scmp.eq.s32.totalorder %s18, 0
    %p170 = por %p168, %p169
    %p171 = scmp.ne.s32.totalorder %s157, %s158
    %p172 = scmp.eq.s32.totalorder %s19, 1
    %p173 = por %p171, %p172
    %p175 = scmp.ne.s32.totalorder %s158, %s174
    %p176 = scmp.eq.s32.totalorder %s19, 0
    %p177 = por %p175, %p176
    %p178 = scmp.le.s32.totalorder 1, %s13
    %p179 = scmp.lt.s32.totalorder %s13, 3
    %p180 = pnand %p178, %p179
    %p181 = pneg %p180
    // Predicated region
    $region9: #{featguide_drop.1} parent=5 // pred_check
      _
    $region10: #{featguide_drop.1} parent=5 // pred_check_branch
      %183 = sbr.rel (%p180) target = $region12
    $region11: #{featguide_drop.1} parent=5 // pred_region
      %s184 = ssub.s32 %s13, 1
      // Predicated region
      $region13: #{featguide_drop.1} parent=11 // pred_check
        %p185 = pneg %p60
      $region14: #{featguide_drop.1} parent=11 // pred_check_branch
        %187 = sbr.rel (%p185) target = $region16
      $region15: #{featguide_drop.1} parent=11 // pred_region
        _
      $region16: #{featguide_drop.1} parent=11 // pred_fallthru
        _
      // Predicated region
      $region17: #{featguide_drop.1} parent=11 // pred_check
        %p188 = pneg %p81
      $region18: #{featguide_drop.1} parent=11 // pred_check_branch
        %190 = sbr.rel (%p188) target = $region20
      $region19: #{featguide_drop.1} parent=11 // pred_region
        _
      $region20: #{featguide_drop.1} parent=11 // pred_fallthru
        _
      // Predicated region
      $region21: #{featguide_drop.1} parent=11 // pred_check
        %p191 = pneg %p102
      $region22: #{featguide_drop.1} parent=11 // pred_check_branch
        %193 = sbr.rel (%p191) target = $region24
      $region23: #{featguide_drop.1} parent=11 // pred_region
        _
      $region24: #{featguide_drop.1} parent=11 // pred_fallthru
        _
      // Predicated region
      $region25: #{featguide_drop.1} parent=11 // pred_check
        %p194 = pneg %p123
      $region26: #{featguide_drop.1} parent=11 // pred_check_branch
        %196 = sbr.rel (%p194) target = $region28
      $region27: #{featguide_drop.1} parent=11 // pred_region
        _
      $region28: #{featguide_drop.1} parent=11 // pred_fallthru
        _
      // Predicated region
      $region29: #{featguide_drop.1} parent=11 // pred_check
        %p197 = pneg %p144
      $region30: #{featguide_drop.1} parent=11 // pred_check_branch
        %199 = sbr.rel (%p197) target = $region32
      $region31: #{featguide_drop.1} parent=11 // pred_region
        _
      $region32: #{featguide_drop.1} parent=11 // pred_fallthru
        _
    $region12: #{featguide_drop.1} parent=5 // pred_fallthru
      _
    %p200 = scmp.lt.s32.totalorder %s13, 2
    // Predicated region
    $region33: #{featguide_drop.1} parent=5 // pred_check
      %p201 = pneg %p200
    $region34: #{featguide_drop.1} parent=5 // pred_check_branch
      %203 = sbr.rel (%p201) target = $region36
    $region35: #{featguide_drop.1} parent=5 // pred_region
      // Predicated region
      $region37: #{featguide_drop.1} parent=35 // pred_check
        %p204 = pneg %p33
      $region38: #{featguide_drop.1} parent=35 // pred_check_branch
        %206 = sbr.rel (%p204) target = $region40
      $region39: #{featguide_drop.1} parent=35 // pred_region
        %p207 = scmp.lt.s32.totalorder %s13, 1
        %s208 = scalar_select %p207, %s13, 1
        %s209 = smul.addr %s208, 4
        %s210 = smul.addr %s209, 8
        %s211 = scalar_lea.vmem %s0, %s210
      $region40: #{featguide_drop.1} parent=35 // pred_fallthru
        _
    $region36: #{featguide_drop.1} parent=5 // pred_fallthru
      _
    %p212 = scmp.le.s32.totalorder 1, %s13
    %p213 = scmp.lt.s32.totalorder %s13, 3
    %p214 = pnand %p212, %p213
    %p215 = pneg %p214
    // Predicated region
    $region41: #{featguide_drop.1} parent=5 // pred_check
      _
    $region42: #{featguide_drop.1} parent=5 // pred_check_branch
      %217 = sbr.rel (%p214) target = $region44
    $region43: #{featguide_drop.1} parent=5 // pred_region
      %s218 = ssub.s32 %s13, 1
      %p219 = scmp.lt.s32.totalorder %s18, 1
      %s220 = scalar_select %p219, %s18, 1
      %s221 = smul.addr %s220, 4
      %s222 = smul.addr %s221, 8
      %s223 = scalar_lea.vmem %s0, %s222
      %p224 = pneg %p39
      %p225 = pneg %p36
      %p226 = pneg %p60
      %p227 = pneg %p57
      %p228 = pneg %p81
      %p229 = pneg %p78
      %p230 = pneg %p102
      %p231 = pneg %p99
      %p232 = pneg %p123
      %p233 = pneg %p120
      %p234 = pneg %p144
      %p235 = pneg %p141
      %p236 = pneg %p170
      %p237 = pneg %p167
      %p238 = scmp.lt.s32.totalorder %s18, 1
      %s239 = scalar_select %p238, %s18, 1
      %s240 = smul.addr %s239, 4
      %s241 = smul.addr %s240, 8
      %s242 = scalar_lea.vmem %s6, %s241
      %p243 = scmp.lt.s32.totalorder %s18, 1
      %s244 = scalar_select %p243, %s18, 1
      %s245 = smul.addr %s244, 4
      %s246 = smul.addr %s245, 8
      %s247 = scalar_lea.vmem %s0, %s246
      %p248 = scmp.lt.s32.totalorder %s18, 1
      %s249 = scalar_select %p248, %s18, 1
      %s250 = smul.addr %s249, 4
      %s251 = smul.addr %s250, 8
      %s252 = scalar_lea.vmem %s6, %s251
      %s254 = sld [smem:[#allocation2]]
      %v255 = vld [vmem:[%s1] sm:$0x3]
      %v256 = vld [vmem:[%s2] sm:$0xf]
      %v257 = vld [vmem:[%s2 + $0x4] sm:$0xf]
      %v258 = vld [vmem:[%s3] sm:$0xff]
      %v259 = vld [vmem:[%s3 + $0x8] sm:$0xff]
      %v260 = vld [vmem:[%s4] sm:$0xf]
      %v261 = vld [vmem:[%s4 + $0x4] sm:$0xf]
      %v262 = vld [vmem:[%s4 + $0x8] sm:$0xf]
      %v263 = vld [vmem:[%s4 + $0xc] sm:$0xf]
      %v264 = vld [vmem:[%s4 + $0x10] sm:$0xf]
      %v265 = vld [vmem:[%s4 + $0x14] sm:$0xf]
      %v266 = vld [vmem:[%s4 + $0x18] sm:$0xf]
      %v267 = vld [vmem:[%s4 + $0x1c] sm:$0xf]
      %v268 = vld [vmem:[%s4 + $0x20] sm:$0xf]
      %v269 = vld [vmem:[%s4 + $0x24] sm:$0xf]
      %v270 = vld [vmem:[%s4 + $0x28] sm:$0xf]
      %v271 = vld [vmem:[%s4 + $0x2c] sm:$0xf]
      %v272 = vld [vmem:[%s4 + $0x30] sm:$0xf]
      %v273 = vld [vmem:[%s4 + $0x34] sm:$0xf]
      %v274 = vld [vmem:[%s4 + $0x38] sm:$0xf]
      %v275 = vld [vmem:[%s4 + $0x3c] sm:$0xf]
      %v276 = vld [vmem:[%s4 + $0x40] sm:$0xf]
      %v277 = vld [vmem:[%s4 + $0x44] sm:$0xf]
      %v278 = vld [vmem:[%s4 + $0x48] sm:$0xf]
      %v279 = vld [vmem:[%s4 + $0x4c] sm:$0xf]
      %v280 = vld [vmem:[%s4 + $0x50] sm:$0xf]
      %v281 = vld [vmem:[%s4 + $0x54] sm:$0xf]
      %v282 = vld [vmem:[%s4 + $0x58] sm:$0xf]
      %v283 = vld [vmem:[%s4 + $0x5c] sm:$0xf]
      %v284 = vld [vmem:[%s4 + $0x60] sm:$0xf]
      %v285 = vld [vmem:[%s4 + $0x64] sm:$0xf]
      %v286 = vld [vmem:[%s4 + $0x68] sm:$0xf]
      %v287 = vld [vmem:[%s4 + $0x6c] sm:$0xf]
      %v288 = vld [vmem:[%s4 + $0x70] sm:$0xf]
      %v289 = vld [vmem:[%s4 + $0x74] sm:$0xf]
      %v290 = vld [vmem:[%s4 + $0x78] sm:$0xf]
      %v291 = vld [vmem:[%s4 + $0x7c] sm:$0xf]
      %v292 = vld [vmem:[%s247] sm:$0xff]
      %v293 = vld [vmem:[%s247 + $0x8] sm:$0xff]
      %v294 = vld [vmem:[%s247 + $0x10] sm:$0xff]
      %v295 = vld [vmem:[%s247 + $0x18] sm:$0xff]
      %v296 = vadd.f32 %v292, %v293
      %297 = vadd.xlane.f32.xlu0 %v296
      %v298 = vpop.xlane.xlu0 %297
      %v299 = vadd.f32 %v294, %v295
      %300 = vadd.xlane.f32.xlu0 %v299
      %v301 = vpop.xlane.xlu0 %300
      %v302 = vrcp.pop 256.0
      %v303 = vmul.f32 %v298, %v302
      %v304 = vmul.f32 %v301, %v302
      %v305 = vpack.c.bf16 %v304, %v303
      %vm306 = vcmask 130048
      %v308 = vsel %vm306, %v255, 0
      %310 = vmatprep.subr.bf16.mxu0 0
      %311 = vmatpush1.bf16.msra.mxu0 0
      %312 = vmatprep.subr.bf16.mxu0 0
      %313 = vmatpush1.bf16.msra.mxu0 0
      %314 = vmatprep.subr.bf16.mxu0 0
      %315 = vmatpush1.bf16.msra.mxu0 0
      %316 = vmatprep.subr.bf16.mxu0 0
      %317 = vmatpush1.bf16.msra.mxu0 0
      %318 = vmatprep.subr.bf16.mxu0 0
      %319 = vmatpush1.bf16.msra.mxu0 0
      %320 = vmatprep.subr.bf16.mxu0 0
      %321 = vmatpush1.bf16.msra.mxu0 0
      %322 = vmatprep.subr.bf16.mxu0 0
      %323 = vmatpush1.bf16.msra.mxu0 0
      %324 = vmatprep.subr.bf16.mxu0 0
      %325 = vmatpush1.bf16.msra.mxu0 %v305
      %326 = vmatprep.subr.bf16.mxu0 0
      %327 = vmatpush2.bf16.msra.mxu0 0
      %328 = vmatprep.subr.bf16.mxu0 0
      %329 = vmatpush2.bf16.msra.mxu0 0
      %330 = vmatprep.subr.bf16.mxu0 0
      %331 = vmatpush2.bf16.msra.mxu0 0
      %332 = vmatprep.subr.bf16.mxu0 0
      %333 = vmatpush2.bf16.msra.mxu0 0
      %334 = vmatprep.subr.bf16.mxu0 0
      %335 = vmatpush2.bf16.msra.mxu0 0
      %336 = vmatprep.subr.bf16.mxu0 0
      %337 = vmatpush2.bf16.msra.mxu0 0
      %338 = vmatprep.subr.bf16.mxu0 0
      %339 = vmatpush2.bf16.msra.mxu0 0
      %340 = vmatprep.subr.bf16.mxu0 0
      %341 = vmatpush2.bf16.msra.mxu0 0
      %342 = vmatprep.mubr.bf16.mxu0 0
      %343 = vmatmul.mubr.bf16.gmra.mxu0 %v308
      %v344 = vpop.f32.mrf.mxu0
      %v345 = vadd.f32 0.0, %v344
      %v346 = vpop.f32.mrf.mxu0
      %v347 = vpop.f32.mrf.mxu0
      %v348 = vpop.f32.mrf.mxu0
      %349 = vdwg.mxu0
      %v350 = vmax.f32 %v345, 0.0
      %v351 = vpack.c.bf16 %v350, %v350
      %v354 = vunpack.c.l.b16 %v256
      %v355 = vunpack.c.l.b16 %v257
      %v356 = vpack.c.b16 %v355, %v354
      %vm357 = vcmask 31744
      %v359 = vsel %vm357, %v356, 0
      %vm361 = vcmask 1041408
      %v363 = vsel %vm361, %v351, 0
      %365 = vmatprep.subr.bf16.mxu0 0
      %366 = vmatpush1.bf16.msra.mxu0 0
      %367 = vmatprep.subr.bf16.mxu0 0
      %368 = vmatpush1.bf16.msra.mxu0 0
      %369 = vmatprep.subr.bf16.mxu0 0
      %370 = vmatpush1.bf16.msra.mxu0 0
      %371 = vmatprep.subr.bf16.mxu0 0
      %372 = vmatpush1.bf16.msra.mxu0 0
      %373 = vmatprep.subr.bf16.mxu0 0
      %374 = vmatpush1.bf16.msra.mxu0 0
      %375 = vmatprep.subr.bf16.mxu0 0
      %376 = vmatpush1.bf16.msra.mxu0 0
      %377 = vmatprep.subr.bf16.mxu0 0
      %378 = vmatpush1.bf16.msra.mxu0 0
      %379 = vmatprep.subr.bf16.mxu0 0
      %380 = vmatpush1.bf16.msra.mxu0 %v363
      %381 = vmatprep.subr.bf16.mxu0 0
      %382 = vmatpush2.bf16.msra.mxu0 0
      %383 = vmatprep.subr.bf16.mxu0 0
      %384 = vmatpush2.bf16.msra.mxu0 0
      %385 = vmatprep.subr.bf16.mxu0 0
      %386 = vmatpush2.bf16.msra.mxu0 0
      %387 = vmatprep.subr.bf16.mxu0 0
      %388 = vmatpush2.bf16.msra.mxu0 0
      %389 = vmatprep.subr.bf16.mxu0 0
      %390 = vmatpush2.bf16.msra.mxu0 0
      %391 = vmatprep.subr.bf16.mxu0 0
      %392 = vmatpush2.bf16.msra.mxu0 0
      %393 = vmatprep.subr.bf16.mxu0 0
      %394 = vmatpush2.bf16.msra.mxu0 0
      %395 = vmatprep.subr.bf16.mxu0 0
      %396 = vmatpush2.bf16.msra.mxu0 0
      %397 = vmatprep.mubr.bf16.mxu0 0
      %398 = vmatmul.mubr.bf16.gmra.mxu0 %v359
      %v399 = vpop.f32.mrf.mxu0
      %v400 = vadd.f32 0.0, %v399
      %v401 = vpop.f32.mrf.mxu0
      %v402 = vpop.f32.mrf.mxu0
      %v403 = vadd.f32 0.0, %v402
      %v404 = vpop.f32.mrf.mxu0
      %405 = vdwg.mxu0
      %v406 = vxor.u32 %v400, 2147483648
      %v407 = vxor.u32 %v403, 2147483648
      %v408 = vmul.f32 %v406, 1.442695
      %v409 = vpow.pop %v408
      %v410 = vmul.f32 %v407, 1.442695
      %v411 = vpow.pop %v410
      %v412 = vadd.f32 %v409, 1.0
      %v413 = vadd.f32 %v411, 1.0
      %v414 = vrcp.pop %v412
      %v415 = vmul.f32 1.0, %v414
      %v416 = vrcp.pop %v413
      %v417 = vmul.f32 1.0, %v416
      %419 = vset.pattern.permute.xlu0 0
      %420 = vperm.xlu0 %419, %v415
      %v421 = vpop.permute.xlu0 %420
      %424 = vset.pattern.permute.xlu0 0
      %425 = vperm.xlu0 %424, %v417
      %v426 = vpop.permute.xlu0 %425
      %v428 = vmul.f32 %v292, %v421
      %v429 = vmul.f32 %v293, %v421
      %v430 = vmul.f32 %v294, %v426
      %v431 = vmul.f32 %v295, %v426
      %v433 = vsel %vm306, 0.0625, 0
      %435 = vmatprep.subr.mxu0 0.0
      %436 = vmatpush1.msra.mxu0 0.0
      %437 = vmatprep.subr.mxu0 0.0
      %438 = vmatpush1.msra.mxu0 0.0
      %439 = vmatprep.subr.mxu0 0.0
      %440 = vmatpush1.msra.mxu0 0.0
      %441 = vmatprep.subr.mxu0 0.0
      %442 = vmatpush1.msra.mxu0 0.0
      %443 = vmatprep.subr.mxu0 0.0
      %444 = vmatpush1.msra.mxu0 0.0
      %445 = vmatprep.subr.mxu0 0.0
      %446 = vmatpush1.msra.mxu0 0.0
      %447 = vmatprep.subr.mxu0 0.0
      %448 = vmatpush1.msra.mxu0 0.0
      %449 = vmatprep.subr.mxu0 0.0
      %450 = vmatpush1.msra.mxu0 0.0
      %451 = vmatprep.subr.mxu0 0.0
      %452 = vmatpush1.msra.mxu0 0.0
      %453 = vmatprep.subr.mxu0 0.0
      %454 = vmatpush1.msra.mxu0 0.0
      %455 = vmatprep.subr.mxu0 0.0
      %456 = vmatpush1.msra.mxu0 0.0
      %457 = vmatprep.subr.mxu0 0.0
      %458 = vmatpush1.msra.mxu0 0.0
      %459 = vmatprep.subr.mxu0 0.0
      %460 = vmatpush1.msra.mxu0 0.0
      %461 = vmatprep.subr.mxu0 0.0
      %462 = vmatpush1.msra.mxu0 0.0
      %463 = vmatprep.subr.mxu0 %v431
      %464 = vmatpush1.msra.mxu0 %v430
      %465 = vmatprep.subr.mxu0 %v429
      %466 = vmatpush1.msra.mxu0 %v428
      %467 = vmatprep.subr.mxu0 0.0
      %468 = vmatpush2.msra.mxu0 0.0
      %469 = vmatprep.subr.mxu0 0.0
      %470 = vmatpush2.msra.mxu0 0.0
      %471 = vmatprep.subr.mxu0 0.0
      %472 = vmatpush2.msra.mxu0 0.0
      %473 = vmatprep.subr.mxu0 0.0
      %474 = vmatpush2.msra.mxu0 0.0
      %475 = vmatprep.subr.mxu0 0.0
      %476 = vmatpush2.msra.mxu0 0.0
      %477 = vmatprep.subr.mxu0 0.0
      %478 = vmatpush2.msra.mxu0 0.0
      %479 = vmatprep.subr.mxu0 0.0
      %480 = vmatpush2.msra.mxu0 0.0
      %481 = vmatprep.subr.mxu0 0.0
      %482 = vmatpush2.msra.mxu0 0.0
      %483 = vmatprep.subr.mxu0 0.0
      %484 = vmatpush2.msra.mxu0 0.0
      %485 = vmatprep.subr.mxu0 0.0
      %486 = vmatpush2.msra.mxu0 0.0
      %487 = vmatprep.subr.mxu0 0.0
      %488 = vmatpush2.msra.mxu0 0.0
      %489 = vmatprep.subr.mxu0 0.0
      %490 = vmatpush2.msra.mxu0 0.0
      %491 = vmatprep.subr.mxu0 0.0
      %492 = vmatpush2.msra.mxu0 0.0
      %493 = vmatprep.subr.mxu0 0.0
      %494 = vmatpush2.msra.mxu0 0.0
      %495 = vmatprep.subr.mxu0 0.0
      %496 = vmatpush2.msra.mxu0 0.0
      %497 = vmatprep.subr.mxu0 0.0
      %498 = vmatpush2.msra.mxu0 0.0
      %499 = vmatprep.mubr.f32.mxu0 0.0
      %500 = vmatmul.mubr.f32.gmra.mxu0 %v433
      %v501 = vpop.f32.mrf.mxu0
      %v502 = vadd.f32 0.0, %v501
      %v503 = vpop.f32.mrf.mxu0
      %v504 = vadd.f32 0.0, %v503
      %505 = vdwg.mxu0
      %v506 = vpack.c.bf16 %v502, %v502
      %v507 = vpack.c.bf16 %v504, %v504
      %v509 = vpack.i.b16 %v506, %v506
      %v511 = vlaneseq
      %v512 = vshrl.u32 %v511, 7
      %v513 = vsub.s32 0, %v512
      %v514 = vrot.slane %v509, %v513
      %v516 = vpack.i.b16 %v507, %v507
      %v518 = vlaneseq
      %v519 = vshrl.u32 %v518, 7
      %v520 = vsub.s32 0, %v519
      %v521 = vrot.slane %v516, %v520
      %v524 = vunpack.c.l.b16 %v514
      %v525 = vunpack.c.l.b16 %v521
      %v526 = vpack.c.b16 %v525, %v524
      %v528 = vmul.bf16 %v258, %v526
      %v529 = vmul.bf16 %v259, %v526
      %v532 = vunpack.c.l.b16 %v528
      %v533 = vunpack.c.h.b16 %v528
      %v534 = vunpack.c.l.b16 %v529
      %v535 = vunpack.c.h.b16 %v529
      %v536 = vpack.c.b16 %v534, %v532
      %v537 = vpack.c.b16 %v535, %v533
      %v572 = vunpack.c.l.b16 %v260
      %v573 = vunpack.c.l.b16 %v261
      %v574 = vunpack.c.l.b16 %v262
      %v575 = vunpack.c.l.b16 %v263
      %v576 = vunpack.c.l.b16 %v264
      %v577 = vunpack.c.l.b16 %v265
      %v578 = vunpack.c.l.b16 %v266
      %v579 = vunpack.c.l.b16 %v267
      %v580 = vunpack.c.l.b16 %v268
      %v581 = vunpack.c.l.b16 %v269
      %v582 = vunpack.c.l.b16 %v270
      %v583 = vunpack.c.l.b16 %v271
      %v584 = vunpack.c.l.b16 %v272
      %v585 = vunpack.c.l.b16 %v273
      %v586 = vunpack.c.l.b16 %v274
      %v587 = vunpack.c.l.b16 %v275
      %v588 = vunpack.c.l.b16 %v276
      %v589 = vunpack.c.l.b16 %v277
      %v590 = vunpack.c.l.b16 %v278
      %v591 = vunpack.c.l.b16 %v279
      %v592 = vunpack.c.l.b16 %v280
      %v593 = vunpack.c.l.b16 %v281
      %v594 = vunpack.c.l.b16 %v282
      %v595 = vunpack.c.l.b16 %v283
      %v596 = vunpack.c.l.b16 %v284
      %v597 = vunpack.c.l.b16 %v285
      %v598 = vunpack.c.l.b16 %v286
      %v599 = vunpack.c.l.b16 %v287
      %v600 = vunpack.c.l.b16 %v288
      %v601 = vunpack.c.l.b16 %v289
      %v602 = vunpack.c.l.b16 %v290
      %v603 = vunpack.c.l.b16 %v291
      %v604 = vpack.c.b16 %v573, %v572
      %v605 = vpack.c.b16 %v575, %v574
      %v606 = vpack.c.b16 %v577, %v576
      %v607 = vpack.c.b16 %v579, %v578
      %v608 = vpack.c.b16 %v581, %v580
      %v609 = vpack.c.b16 %v583, %v582
      %v610 = vpack.c.b16 %v585, %v584
      %v611 = vpack.c.b16 %v587, %v586
      %v612 = vpack.c.b16 %v589, %v588
      %v613 = vpack.c.b16 %v591, %v590
      %v614 = vpack.c.b16 %v593, %v592
      %v615 = vpack.c.b16 %v595, %v594
      %v616 = vpack.c.b16 %v597, %v596
      %v617 = vpack.c.b16 %v599, %v598
      %v618 = vpack.c.b16 %v601, %v600
      %v619 = vpack.c.b16 %v603, %v602
      %636 = vmatprep.subr.bf16.mxu0 0
      %637 = vmatpush1.bf16.msra.mxu0 %v611
      %638 = vmatprep.subr.bf16.mxu0 0
      %639 = vmatpush1.bf16.msra.mxu0 %v610
      %640 = vmatprep.subr.bf16.mxu0 0
      %641 = vmatpush1.bf16.msra.mxu0 %v609
      %642 = vmatprep.subr.bf16.mxu0 0
      %643 = vmatpush1.bf16.msra.mxu0 %v608
      %644 = vmatprep.subr.bf16.mxu0 0
      %645 = vmatpush1.bf16.msra.mxu0 %v607
      %646 = vmatprep.subr.bf16.mxu0 0
      %647 = vmatpush1.bf16.msra.mxu0 %v606
      %648 = vmatprep.subr.bf16.mxu0 0
      %649 = vmatpush1.bf16.msra.mxu0 %v605
      %650 = vmatprep.subr.bf16.mxu0 0
      %651 = vmatpush1.bf16.msra.mxu0 %v604
      %652 = vmatprep.subr.bf16.mxu0 0
      %653 = vmatpush2.bf16.msra.mxu0 %v619
      %654 = vmatprep.subr.bf16.mxu0 0
      %655 = vmatpush2.bf16.msra.mxu0 %v618
      %656 = vmatprep.subr.bf16.mxu0 0
      %657 = vmatpush2.bf16.msra.mxu0 %v617
      %658 = vmatprep.subr.bf16.mxu0 0
      %659 = vmatpush2.bf16.msra.mxu0 %v616
      %660 = vmatprep.subr.bf16.mxu0 0
      %661 = vmatpush2.bf16.msra.mxu0 %v615
      %662 = vmatprep.subr.bf16.mxu0 0
      %663 = vmatpush2.bf16.msra.mxu0 %v614
      %664 = vmatprep.subr.bf16.mxu0 0
      %665 = vmatpush2.bf16.msra.mxu0 %v613
      %666 = vmatprep.subr.bf16.mxu0 0
      %667 = vmatpush2.bf16.msra.mxu0 %v612
      %668 = vmatprep.mubr.bf16.mxu0 %v537
      %669 = vmatmul.mubr.bf16.gmra.mxu0 %v536
      %v670 = vpop.f32.mrf.mxu0
      %v671 = vadd.f32 0.0, %v670
      %v672 = vpop.f32.mrf.mxu0
      %v673 = vpop.f32.mrf.mxu0
      %v674 = vadd.f32 0.0, %v673
      %v675 = vpop.f32.mrf.mxu0
      %676 = vdwg.mxu0
      %v677 = vmul.f32 %v671, 0.11111111
      %v678 = vmul.f32 %v674, 0.11111111
      %v679 = vxor.u32 %v677, 2147483648
      %v680 = vxor.u32 %v678, 2147483648
      %v681 = vmul.f32 %v679, 1.442695
      %v682 = vpow.pop %v681
      %v683 = vmul.f32 %v680, 1.442695
      %v684 = vpow.pop %v683
      %v685 = vadd.f32 %v682, 1.0
      %v686 = vadd.f32 %v684, 1.0
      %v687 = vrcp.pop %v685
      %v688 = vmul.f32 1.0, %v687
      %v689 = vrcp.pop %v686
      %v690 = vmul.f32 1.0, %v689
      %v691 = vsel %vm306, %v688, 0.0
      %v692 = vsel %vm306, %v690, 0.0
      %v693 = vadd.f32 %v691, %v692
      %694 = vadd.xlane.f32.xlu0 %v693
      %v695 = vpop.xlane.xlu0 %694
      %v696 = vrot.slane %v695, 4
      %v697 = vadd.f32 %v695, %v696
      %v698 = vrot.slane %v697, 2
      %v699 = vadd.f32 %v697, %v698
      %v700 = vrot.slane %v699, 1
      %v701 = vadd.f32 %v699, %v700
      %s702 = vtos %v701
      %s703 = smul.f32 %s702, 0.00390625
      %v704 = vstv %s703
      %v705 = vsub.f32 %v688, %v704
      %v706 = vsub.f32 %v690, %v704
      %v707 = vmul.f32 %v705, %v705
      %v708 = vmul.f32 %v706, %v706
      %v709 = vsel %vm306, %v707, 0.0
      %v710 = vsel %vm306, %v708, 0.0
      %v711 = vadd.f32 %v709, %v710
      %712 = vadd.xlane.f32.xlu0 %v711
      %v713 = vpop.xlane.xlu0 %712
      %v714 = vrot.slane %v713, 4
      %v715 = vadd.f32 %v713, %v714
      %v716 = vrot.slane %v715, 2
      %v717 = vadd.f32 %v715, %v716
      %v718 = vrot.slane %v717, 1
      %v719 = vadd.f32 %v717, %v718
      %s720 = vtos %v719
      %s721 = smul.f32 %s720, 0.003921569
      %s722 = smul.f32 %s254, %s721
      %s723 = sadd.f32 %s722, %s703
      %p724 = scmp.ge.f32.partialorder %s723, 1.0
      %s725 = scalar_select %p724, 1.0, 0.0
      %v726 = vstv %s725
      %v727 = vmul.f32 %v428, %v726
      %v728 = vmul.f32 %v429, %v726
      %v729 = vmul.f32 %v430, %v726
      %v730 = vmul.f32 %v431, %v726
      %731 = vst [vmem:[%s252] sm:$0xff] %v727
      %732 = vst [vmem:[%s252 + $0x8] sm:$0xff] %v728
      %733 = vst [vmem:[%s252 + $0x10] sm:$0xff] %v729
      %734 = vst [vmem:[%s252 + $0x18] sm:$0xff] %v730
      %p735 = scmp.lt.s32.totalorder %s18, 1
      %s736 = scalar_select %p735, %s18, 1
      %s737 = smul.addr %s736, 4
      %s738 = smul.addr %s737, 8
      %s739 = scalar_lea.vmem %s6, %s738
      // Predicated region
      $region45: #{featguide_drop.1} parent=43 // pred_check
        %p740 = pneg %p167
      $region46: #{featguide_drop.1} parent=43 // pred_check_branch
        %742 = sbr.rel (%p740) target = $region48
      $region47: #{featguide_drop.1} parent=43 // pred_region
        _
      $region48: #{featguide_drop.1} parent=43 // pred_fallthru
        _
    $region44: #{featguide_drop.1} parent=5 // pred_fallthru
      _
    %p743 = scmp.le.s32.totalorder 2, %s13
    // Predicated region
    $region49: #{featguide_drop.1} parent=5 // pred_check
      %p744 = pneg %p743
    $region50: #{featguide_drop.1} parent=5 // pred_check_branch
      %746 = sbr.rel (%p744) target = $region52
    $region51: #{featguide_drop.1} parent=5 // pred_region
      %s747 = ssub.s32 %s13, 2
      // Predicated region
      $region53: #{featguide_drop.1} parent=51 // pred_check
        %p748 = pneg %p173
      $region54: #{featguide_drop.1} parent=51 // pred_check_branch
        %750 = sbr.rel (%p748) target = $region56
      $region55: #{featguide_drop.1} parent=51 // pred_region
        %p751 = scmp.lt.s32.totalorder %s19, 1
        %s752 = scalar_select %p751, %s19, 1
        %s753 = smul.addr %s752, 4
        %s754 = smul.addr %s753, 8
        %s755 = scalar_lea.vmem %s6, %s754
      $region56: #{featguide_drop.1} parent=51 // pred_fallthru
        _
    $region52: #{featguide_drop.1} parent=5 // pred_fallthru
      _
  $region6: #{featguide_drop.1} parent=0 // loop_footer
    %s17 = sadd.s32 1, %s13
  $region7: #{featguide_drop.1} parent=0 // loop_footer_branch
    %12 = sbr.rel target = $region3
  $region8: #{featguide_drop.1} parent=0 // loop_exit
    _

</llo_original>
